<compile_context>
chip_gen: v7x
topology: tpu7x:2x2x1
jax: 0.10.0
libtpu: 0.0.40
codegen_flags: <defaults>
</compile_context>

<pallas_src>
import jax
import jax.numpy as jnp
from jax import lax
from jax.experimental import pallas as pl
from jax.experimental.pallas import tpu as pltpu

_EPS = 1e-12          # F.normalize default eps
_LANE = 128
_MAX_TILE = 512
_VMEM_BUDGET = 24 * 1024 * 1024   # per-step working set target (fits all gens)


def _round_up(v, m):
    return ((v + m - 1) // m) * m


def _tile_candidates(total, unit, cap):
    """Divisors of `total` that are multiples of `unit` and <= cap, descending."""
    m = total // unit
    dmax = max(1, min(m, cap // unit))
    cands = [d * unit for d in range(1, dmax + 1) if m % d == 0]
    return sorted(cands, reverse=True) or [unit]


def _working_set_bytes(tile_b, tile_c, f_pad, in_itemsize, out_itemsize):
    # double-buffered input tiles + double-buffered output tile + norm vectors
    return (2 * (tile_b + tile_c) * f_pad * in_itemsize
            + 2 * tile_b * tile_c * out_itemsize
            + 2 * (tile_b + tile_c) * 4)


def _cosine_classifier_kernel(x_ref, w_ref, inv_x_ref, inv_w_ref, o_ref):
    # Raw matmul on native-dtype operands, contracting the feature axis of
    # both (weight stays in its stored [C, F] layout -> no transpose).
    raw = lax.dot_general(
        x_ref[...], w_ref[...],
        dimension_numbers=(((1,), (1,)), ((), ())),
        preferred_element_type=jnp.float32,
    )                                                     # [tile_b, tile_c] f32
    # Post-matmul rescale: outer product of precomputed reciprocal row norms.
    o_ref[...] = (raw * inv_x_ref[...] * inv_w_ref[...]).astype(o_ref.dtype)


def prepare_classifier_weight(weight):
    """One-time parameter prep (analogue of module init).

    Pads weight to lane-aligned (c_pad, f_pad) and precomputes the reciprocal
    row norms as a lane-major [1, c_pad] f32 vector.
    """
    C, F = weight.shape
    f_pad = _round_up(F, _LANE)
    c_pad = _round_up(C, _LANE)
    wp = weight
    if (c_pad, f_pad) != (C, F):
        wp = jnp.pad(weight, ((0, c_pad - C), (0, f_pad - F)))
    w_ss = jnp.sum(jnp.square(wp.astype(jnp.float32)), axis=-1, keepdims=True)
    # 1 / max(||w||, eps) == rsqrt(max(sum_sq, eps^2));   shape [1, c_pad]
    inv_w = lax.rsqrt(jnp.maximum(w_ss, _EPS * _EPS)).reshape(1, c_pad)
    return wp, inv_w


def classifier_forward(x, w_padded, inv_w, num_classes):
    """x: [B, feat_in]; w_padded: [c_pad, f_pad]; inv_w: [1, c_pad] -> [B, num_classes]."""
    B, F = x.shape
    c_pad, f_pad = w_padded.shape
    assert F <= f_pad < F + _LANE, "x feature dim inconsistent with prepared weight"

    in_itemsize = jnp.dtype(x.dtype).itemsize
    out_itemsize = in_itemsize
    sublane = 8 if in_itemsize == 4 else (16 if in_itemsize == 2 else 32)

    b_pad = _round_up(B, sublane)

    # Tile sizes: divisors of the padded dims (zero extra padding waste),
    # largest that fit the VMEM working-set budget.
    cands_b = _tile_candidates(b_pad, sublane, _MAX_TILE)
    cands_c = _tile_candidates(c_pad, _LANE, _MAX_TILE)
    tile_b, tile_c = cands_b[-1], cands_c[-1]
    done = False
    for tb in cands_b:
        for tc in cands_c:
            if _working_set_bytes(tb, tc, f_pad, in_itemsize, out_itemsize) <= _VMEM_BUDGET:
                tile_b, tile_c = tb, tc
                done = True
                break
        if done:
            break

    nb = b_pad // tile_b
    nc = c_pad // tile_c

    # Megacore (v7x): prefer a grid with >= 2 tiles on a parallel axis.
    if nb * nc == 1:
        split_c = [t for t in cands_c if c_pad // t >= 2]
        split_b = [t for t in cands_b if b_pad // t >= 2]
        if split_c:
            tile_c = split_c[0]
            nc = c_pad // tile_c
        elif split_b:
            tile_b = split_b[0]
            nb = b_pad // tile_b

    # Pad only the small x operand per call (weight was pre-padded at init).
    xp = x
    if (b_pad, f_pad) != (B, F):
        xp = jnp.pad(x, ((0, b_pad - B), (0, f_pad - F)))

    # x reciprocal row norms, computed once (tiny fused reduce over the small operand).
    x_ss = jnp.sum(jnp.square(xp.astype(jnp.float32)), axis=-1, keepdims=True)
    inv_x = lax.rsqrt(jnp.maximum(x_ss, _EPS * _EPS))          # [b_pad, 1] f32

    # Grid ordering that minimizes HBM re-streaming:
    #   batch-outer: x fetched nb times,  w fetched nb*nc times
    #   class-outer: w fetched nc times,  x fetched nc*nb times
    traffic_batch_outer = (b_pad + nb * c_pad) * f_pad
    traffic_class_outer = (c_pad + nc * b_pad) * f_pad
    class_outer = traffic_class_outer < traffic_batch_outer

    if class_outer:
        grid = (nc, nb)
        x_map = lambda j, i: (i, 0)
        w_map = lambda j, i: (j, 0)
        ix_map = lambda j, i: (i, 0)
        iw_map = lambda j, i: (0, j)
        o_map = lambda j, i: (i, j)
    else:
        grid = (nb, nc)
        x_map = lambda i, j: (i, 0)
        w_map = lambda i, j: (j, 0)
        ix_map = lambda i, j: (i, 0)
        iw_map = lambda i, j: (0, j)
        o_map = lambda i, j: (i, j)

    cost = pl.CostEstimate(
        flops=2 * b_pad * c_pad * f_pad + 2 * b_pad * c_pad,
        transcendentals=0,
        bytes_accessed=(min(traffic_batch_outer, traffic_class_outer) * in_itemsize
                        + b_pad * c_pad * out_itemsize
                        + (b_pad + c_pad) * 4),
    )

    out = pl.pallas_call(
        _cosine_classifier_kernel,
        out_shape=jax.ShapeDtypeStruct((b_pad, c_pad), x.dtype),
        grid_spec=pltpu.PrefetchScalarGridSpec(
            num_scalar_prefetch=0,
            grid=grid,
            in_specs=[
                pl.BlockSpec((tile_b, f_pad), x_map),
                pl.BlockSpec((tile_c, f_pad), w_map),
                pl.BlockSpec((tile_b, 1), ix_map),
                pl.BlockSpec((1, tile_c), iw_map),
            ],
            out_specs=pl.BlockSpec((tile_b, tile_c), o_map),
        ),
        compiler_params=pltpu.CompilerParams(
            dimension_semantics=("parallel", "parallel"),
            vmem_limit_bytes=32 * 1024 * 1024,
        ),
        cost_estimate=cost,
    )(xp, w_padded, inv_x, inv_w)

    return out[:B, :num_classes]


def _reference(x, weight):
    xn = x / jnp.maximum(jnp.linalg.norm(x, axis=-1, keepdims=True), _EPS)
    wn = weight / jnp.maximum(
        jnp.linalg.norm(weight, axis=-1, keepdims=True), _EPS)
    return xn @ wn.T


if __name__ == "__main__":
    # Small shapes consistent with the module: feat_in=32, num_classes=16, batch=8
    B, feat_in, num_classes = 8, 32, 16

    key = jax.random.PRNGKey(0)
    kx, kw = jax.random.split(key)

    x = jax.random.normal(kx, (B, feat_in), dtype=jnp.float32)
    # Deterministic synthetic init for fc.weight (nn.Linear(feat_in, num_classes, bias=False))
    bound = 1.0 / (feat_in ** 0.5)
    weight = jax.random.uniform(
        kw, (num_classes, feat_in), dtype=jnp.float32, minval=-bound, maxval=bound
    )

    # One-time parameter prep (analogue of module init): pad + weight row norms.
    w_padded, inv_w = prepare_classifier_weight(weight)

    fwd = jax.jit(classifier_forward, static_argnums=(3,))
    logits = jax.block_until_ready(fwd(x, w_padded, inv_w, num_classes))

    ref = _reference(x, weight)
    assert logits.shape == (B, num_classes)
    assert jnp.allclose(logits, ref, atol=1e-5, rtol=1e-5)

    print("KERNEL_OK")
</pallas_src>

<mosaic_0001>
module attributes {stable_mosaic.version = 11 : i64} {
  func.func @_cosine_classifier_kernel(%arg0: i32, %arg1: i32, %arg2: memref<8x128xf32, #tpu.memory_space<vmem>>, %arg3: memref<128x128xf32, #tpu.memory_space<vmem>>, %arg4: memref<8x1xf32, #tpu.memory_space<vmem>>, %arg5: memref<1x128xf32, #tpu.memory_space<vmem>>, %arg6: memref<8x128xf32, #tpu.memory_space<vmem>>) attributes {dimension_semantics = [#tpu.dimension_semantics<parallel>, #tpu.dimension_semantics<parallel>], iteration_bounds = array<i64: 1, 1>, scalar_prefetch = 0 : i64, scratch_operands = 0 : i64, tpu.core_type = #tpu.core_type<tc>, window_params = [{transform_indices = @transform_0, window_bounds = array<i64: 8, 128>}, {transform_indices = @transform_1, window_bounds = array<i64: 128, 128>}, {transform_indices = @transform_2, window_bounds = array<i64: 8, 1>}, {transform_indices = @transform_3, window_bounds = array<i64: 1, 128>}, {transform_indices = @transform_4, window_bounds = array<i64: 8, 128>}]} {
    %c0 = arith.constant 0 : index
    %c0_0 = arith.constant 0 : index
    %0 = vector.load %arg2[%c0, %c0_0] : memref<8x128xf32, #tpu.memory_space<vmem>>, vector<8x128xf32>
    %c0_1 = arith.constant 0 : index
    %c0_2 = arith.constant 0 : index
    %1 = vector.load %arg3[%c0_1, %c0_2] : memref<128x128xf32, #tpu.memory_space<vmem>>, vector<128x128xf32>
    %cst = arith.constant dense<0.000000e+00> : vector<8x128xf32>
    %2 = tpu.matmul %0, %1, %cst {dimension_numbers = #tpu.dot_dimension_numbers<[1], [1], [0], [0], [0, 0, 1, 0], [], []>} : vector<8x128xf32>, vector<128x128xf32>, vector<8x128xf32> -> vector<8x128xf32>
    %c0_3 = arith.constant 0 : index
    %c0_4 = arith.constant 0 : index
    %3 = vector.load %arg4[%c0_3, %c0_4] : memref<8x1xf32, #tpu.memory_space<vmem>>, vector<8x1xf32>
    %4 = vector.broadcast %3 : vector<8x1xf32> to vector<8x128xf32>
    %5 = arith.mulf %2, %4 : vector<8x128xf32>
    %c0_5 = arith.constant 0 : index
    %c0_6 = arith.constant 0 : index
    %6 = vector.load %arg5[%c0_5, %c0_6] : memref<1x128xf32, #tpu.memory_space<vmem>>, vector<1x128xf32>
    %7 = vector.broadcast %6 : vector<1x128xf32> to vector<8x128xf32>
    %8 = arith.mulf %5, %7 : vector<8x128xf32>
    %c0_7 = arith.constant 0 : index
    %c0_8 = arith.constant 0 : index
    %9 = vector.load %arg6[%c0_7, %c0_8] : memref<8x128xf32, #tpu.memory_space<vmem>>, vector<8x128xf32>
    tpu.vector_store %arg6[%c0_7, %c0_8], %8 {strides = array<i32>} : memref<8x128xf32, #tpu.memory_space<vmem>>, vector<8x128xf32>,
    return
  }
  func.func @transform_0(%arg0: i32, %arg1: i32) -> (i32, i32) {
    %c0_i32 = arith.constant 0 : i32
    %c0_i32_0 = arith.constant 0 : i32
    return %arg0, %c0_i32 : i32, i32
  }
  func.func @transform_1(%arg0: i32, %arg1: i32) -> (i32, i32) {
    %c0_i32 = arith.constant 0 : i32
    %c0_i32_0 = arith.constant 0 : i32
    return %arg1, %c0_i32 : i32, i32
  }
  func.func @transform_2(%arg0: i32, %arg1: i32) -> (i32, i32) {
    %c0_i32 = arith.constant 0 : i32
    %c0_i32_0 = arith.constant 0 : i32
    return %arg0, %c0_i32 : i32, i32
  }
  func.func @transform_3(%arg0: i32, %arg1: i32) -> (i32, i32) {
    %c0_i32 = arith.constant 0 : i32
    %c0_i32_0 = arith.constant 0 : i32
    return %c0_i32, %arg1 : i32, i32
  }
  func.func @transform_4(%arg0: i32, %arg1: i32) -> (i32, i32) {
    %c0_i32 = arith.constant 0 : i32
    return %arg0, %arg1 : i32, i32
  }
}

</mosaic_0001>

<llo_original>
// kernel: classifier_forward.1
$region0: #{classifier_forward.1}
  #allocation0 [shape = 'u32[]', space=smem, size = 0x4, offset = 0x4, fixed_abs, tag = 'smem constant byte address 0x4 - core index']
  #allocation1 [shape = 'u32[144,128]{1,0:T(1,128)}', space=vmem, size = 0x12000, scoped, tag = 'internal scratch']
  %s0 = inlined_call_operand.vmem [shape: f32[8,128], index: 0, kind: input, shape index: {}]
  %s1 = inlined_call_operand.hbm [shape: f32[128,128], index: 1, kind: input, shape index: {}]
  %s2 = inlined_call_operand.vmem [shape: f32[8,1], index: 2, kind: input, shape index: {}]
  %s3 = inlined_call_operand.vmem [shape: f32[1,128], index: 3, kind: input, shape index: {}]
  %s4 = inlined_call_operand.hbm [shape: f32[8,128], index: 4, kind: output, shape index: {}]
  %s5 = sld [smem:[#allocation0]]
  $region30: #{classifier_forward.1} parent=0
    _
  %s7 = ssub.s32 1, %s5
  %s8 = scalar_select 0, %s7, %s5
  $region1: #{classifier_forward.1} parent=0
    #allocation2 [shape = 'u8[65536]{0}', space=vmem, size = 0x10000, scoped, tag = 'input window, operand 1, single buffered']
    #allocation3 [shape = 's32[1]{0}', space=sflag, size = 0x4, scoped, tag = 'scoped memory for classifier_forward.1']
    #allocation4 [shape = 's32[1]{0}', space=sflag, size = 0x4, scoped, tag = 'scoped memory for classifier_forward.1']
    #allocation5 [shape = 'u8[4096]{0}', space=vmem, size = 0x1000, scoped, tag = 'output window, operand 0, single buffered']
    %9 = vsyncpa [#allocation3], 0
    %10 = vsyncpa [#allocation4], 0
    // Predicated region
    $region2: #{classifier_forward.1} parent=1 // pred_check
      _
    $region3: #{classifier_forward.1} parent=1 // pred_check_branch
      %12 = sbr.rel (0) target = $region5
    $region4: #{classifier_forward.1} parent=1 // pred_region
      _
    $region5: #{classifier_forward.1} parent=1 // pred_fallthru
      _
    // Predicated region
    $region6: #{classifier_forward.1} parent=1 // pred_check
      _
    $region7: #{classifier_forward.1} parent=1 // pred_check_branch
      %14 = sbr.rel (0) target = $region9
    $region8: #{classifier_forward.1} parent=1 // pred_region
      %s16 = ssub.s32 2048, 2048
      %17 = vsyncadd [#allocation3], %s16
      %s18 = sshll.u32 [#allocation2], 4
      %s19 = int_to_ptr.vmem [resolvable:$true] %s18
      %24 = dma.hbm_to_vmem [thread:$0]  %s1, 2048, %s19, [#allocation3], 128, 128, 8
    $region9: #{classifier_forward.1} parent=1 // pred_fallthru
      _
    // Predicated region
    $region10: #{classifier_forward.1} parent=1 // pred_check
      _
    $region11: #{classifier_forward.1} parent=1 // pred_check_branch
      %26 = sbr.rel (0) target = $region13
    $region12: #{classifier_forward.1} parent=1 // pred_region
      _
    $region13: #{classifier_forward.1} parent=1 // pred_fallthru
      _
    // Predicated region
    $region14: #{classifier_forward.1} parent=1 // pred_check
      _
    $region15: #{classifier_forward.1} parent=1 // pred_check_branch
      %28 = sbr.rel (0) target = $region17
    $region16: #{classifier_forward.1} parent=1 // pred_region
      _
    $region17: #{classifier_forward.1} parent=1 // pred_fallthru
      _
    // Predicated region
    $region18: #{classifier_forward.1} parent=1 // pred_check
      _
    $region19: #{classifier_forward.1} parent=1 // pred_check_branch
      %30 = sbr.rel (0) target = $region21
    $region20: #{classifier_forward.1} parent=1 // pred_region
      %31 = dma.done [#allocation3], 2048
    $region21: #{classifier_forward.1} parent=1 // pred_fallthru
      _
    %v32 = vld [vmem:[%s0] sm:$0xff]
    %v33 = vld [vmem:[#allocation2] sm:$0xff]
    %v34 = vld [vmem:[#allocation2 + $0x8] sm:$0xff]
    %v35 = vld [vmem:[#allocation2 + $0x10] sm:$0xff]
    %v36 = vld [vmem:[#allocation2 + $0x18] sm:$0xff]
    %v37 = vld [vmem:[#allocation2 + $0x20] sm:$0xff]
    %v38 = vld [vmem:[#allocation2 + $0x28] sm:$0xff]
    %v39 = vld [vmem:[#allocation2 + $0x30] sm:$0xff]
    %v40 = vld [vmem:[#allocation2 + $0x38] sm:$0xff]
    %v41 = vld [vmem:[#allocation2 + $0x40] sm:$0xff]
    %v42 = vld [vmem:[#allocation2 + $0x48] sm:$0xff]
    %v43 = vld [vmem:[#allocation2 + $0x50] sm:$0xff]
    %v44 = vld [vmem:[#allocation2 + $0x58] sm:$0xff]
    %v45 = vld [vmem:[#allocation2 + $0x60] sm:$0xff]
    %v46 = vld [vmem:[#allocation2 + $0x68] sm:$0xff]
    %v47 = vld [vmem:[#allocation2 + $0x70] sm:$0xff]
    %v48 = vld [vmem:[#allocation2 + $0x78] sm:$0xff]
    %49 = vmatprep.subr.mxu0 0.0
    %50 = vmatpush1.xpose.msra.mxu0 %v33
    %51 = vmatprep.subr.mxu0 0.0
    %52 = vmatpush1.xpose.msra.mxu0 %v34
    %53 = vmatprep.subr.mxu0 0.0
    %54 = vmatpush1.xpose.msra.mxu0 %v35
    %55 = vmatprep.subr.mxu0 0.0
    %56 = vmatpush1.xpose.msra.mxu0 %v36
    %57 = vmatprep.subr.mxu0 0.0
    %58 = vmatpush1.xpose.msra.mxu0 %v37
    %59 = vmatprep.subr.mxu0 0.0
    %60 = vmatpush1.xpose.msra.mxu0 %v38
    %61 = vmatprep.subr.mxu0 0.0
    %62 = vmatpush1.xpose.msra.mxu0 %v39
    %63 = vmatprep.subr.mxu0 0.0
    %64 = vmatpush1.xpose.msra.mxu0 %v40
    %65 = vmatprep.subr.mxu0 0.0
    %66 = vmatpush1.xpose.msra.mxu0 %v41
    %67 = vmatprep.subr.mxu0 0.0
    %68 = vmatpush1.xpose.msra.mxu0 %v42
    %69 = vmatprep.subr.mxu0 0.0
    %70 = vmatpush1.xpose.msra.mxu0 %v43
    %71 = vmatprep.subr.mxu0 0.0
    %72 = vmatpush1.xpose.msra.mxu0 %v44
    %73 = vmatprep.subr.mxu0 0.0
    %74 = vmatpush1.xpose.msra.mxu0 %v45
    %75 = vmatprep.subr.mxu0 0.0
    %76 = vmatpush1.xpose.msra.mxu0 %v46
    %77 = vmatprep.subr.mxu0 0.0
    %78 = vmatpush1.xpose.msra.mxu0 %v47
    %79 = vmatprep.subr.mxu0 0.0
    %80 = vmatpush1.xpose.msra.mxu0 %v48
    %81 = vmatprep.subr.mxu0 0.0
    %82 = vmatpush1.xpose.msra.mxu0 0.0
    %83 = vmatprep.subr.mxu0 0.0
    %84 = vmatpush1.xpose.msra.mxu0 0.0
    %85 = vmatprep.subr.mxu0 0.0
    %86 = vmatpush1.xpose.msra.mxu0 0.0
    %87 = vmatprep.subr.mxu0 0.0
    %88 = vmatpush1.xpose.msra.mxu0 0.0
    %89 = vmatprep.subr.mxu0 0.0
    %90 = vmatpush1.xpose.msra.mxu0 0.0
    %91 = vmatprep.subr.mxu0 0.0
    %92 = vmatpush1.xpose.msra.mxu0 0.0
    %93 = vmatprep.subr.mxu0 0.0
    %94 = vmatpush1.xpose.msra.mxu0 0.0
    %95 = vmatprep.subr.mxu0 0.0
    %96 = vmatpush1.xpose.msra.mxu0 0.0
    %97 = vmatprep.subr.mxu0 0.0
    %98 = vmatpush1.xpose.msra.mxu0 0.0
    %99 = vmatprep.subr.mxu0 0.0
    %100 = vmatpush1.xpose.msra.mxu0 0.0
    %101 = vmatprep.subr.mxu0 0.0
    %102 = vmatpush1.xpose.msra.mxu0 0.0
    %103 = vmatprep.subr.mxu0 0.0
    %104 = vmatpush1.xpose.msra.mxu0 0.0
    %105 = vmatprep.subr.mxu0 0.0
    %106 = vmatpush1.xpose.msra.mxu0 0.0
    %107 = vmatprep.subr.mxu0 0.0
    %108 = vmatpush1.xpose.msra.mxu0 0.0
    %109 = vmatprep.subr.mxu0 0.0
    %110 = vmatpush1.xpose.msra.mxu0 0.0
    %111 = vmatprep.subr.mxu0 0.0
    %112 = vmatpush1.xpose.msra.mxu0 0.0
    %113 = vmatprep.mubr.f32.mxu0 0.0
    %114 = vmatmul.mubr.f32.gmra.mrb[0].mxu0 %v32
    %v115 = vpop.f32.mrb[0].mxu0
    %v116 = vadd.f32 0.0, %v115
    %v117 = vpop.f32.mrb[0].mxu0
    %118 = vdwg.mxu0
    %v119 = vld [vmem:[%s2] sm:$0xff]
    %121 = vset.pattern.permute.xlu0 0
    %122 = vperm.xlu0 %121, %v119
    %v123 = vpop.permute.xlu0 %122
    %v125 = vmul.f32 %v116, %v123
    %v126 = vld [vmem:[%s3] sm:$0x1]
    %v128 = vlaneseq
    %v129 = vshrl.u32 %v128, 7
    %v130 = vsub.s32 0, %v129
    %v131 = vrot.slane %v126, %v130
    %v133 = vmul.f32 %v125, %v131
    %134 = vst [vmem:[#allocation5] sm:$0xff] %v133
    // Predicated region
    $region22: #{classifier_forward.1} parent=1 // pred_check
      _
    $region23: #{classifier_forward.1} parent=1 // pred_check_branch
      %136 = sbr.rel (0) target = $region25
    $region24: #{classifier_forward.1} parent=1 // pred_region
      %s138 = ssub.s32 128, 128
      %139 = vsyncadd [#allocation4], %s138
      %s141 = sshll.u32 [#allocation5], 4
      %s142 = int_to_ptr.vmem [resolvable:$true] %s141
      %144 = dma.vmem_to_hbm [thread:$0]  %s142, 128, %s4, [#allocation4]
    $region25: #{classifier_forward.1} parent=1 // pred_fallthru
      _
    // Predicated region
    $region26: #{classifier_forward.1} parent=1 // pred_check
      _
    $region27: #{classifier_forward.1} parent=1 // pred_check_branch
      %146 = sbr.rel (0) target = $region29
    $region28: #{classifier_forward.1} parent=1 // pred_region
      %147 = dma.done [#allocation4], 128
    $region29: #{classifier_forward.1} parent=1 // pred_fallthru
      _
    %148 = vsyncpa [#allocation3], 1
    %149 = vsyncpa [#allocation4], 1

</llo_original>
